<compile_context>
chip_gen: v7x
topology: tpu7x:2x2x1
jax: 0.10.0
libtpu: 0.0.40
codegen_flags: <defaults>
</compile_context>

<pallas_src>
import functools

import jax
import jax.numpy as jnp
from jax.experimental import pallas as pl
from jax.experimental.pallas import tpu as pltpu


def _s6_kernel(x_ref, w1_ref, b1_ref, w2_ref, b2_ref, w3_ref, b3_ref, y_ref):
    # x_ref: (tm, D); w1: (D, D); w2/w3: (D, N); biases: (1, D)/(1, N)
    x = x_ref[...].astype(jnp.float32)

    z = jnp.dot(x, w1_ref[...].astype(jnp.float32),
                preferred_element_type=jnp.float32) + b1_ref[...].astype(jnp.float32)
    # numerically stable softplus: log(1+exp(z)) = max(z,0) + log(1+exp(-|z|))
    delta = jnp.maximum(z, 0.0) + jnp.log(1.0 + jnp.exp(-jnp.abs(z)))

    b_mat = jnp.dot(x, w2_ref[...].astype(jnp.float32),
                    preferred_element_type=jnp.float32) + b2_ref[...].astype(jnp.float32)
    c_mat = jnp.dot(x, w3_ref[...].astype(jnp.float32),
                    preferred_element_type=jnp.float32) + b3_ref[...].astype(jnp.float32)

    # sum_n B[b,l,n] * C[b,l,n]  -> (tm, 1)
    s = jnp.sum(b_mat * c_mat, axis=-1, keepdims=True)

    y_ref[...] = (x * delta * s).astype(y_ref.dtype)


def s6_forward(x, w1, b1, w2, b2, w3, b3, *, block_rows=256):
    """x: (B, L, D). w1: (D, D), w2/w3: (N, D) (torch Linear layout). Returns (B, L, D)."""
    bsz, seq_len, d_model = x.shape
    n_state = w2.shape[0]
    m = bsz * seq_len

    x2 = x.reshape(m, d_model)

    # Row tile: multiple of 8 (sublane) or full extent; pad rows if needed.
    if m <= block_rows:
        tm = m
        m_pad = m
    else:
        tm = block_rows
        m_pad = pl.cdiv(m, tm) * tm
    if m_pad != m:
        x2 = jnp.pad(x2, ((0, m_pad - m), (0, 0)))

    # Pre-transpose weights once so the kernel does plain x @ W.
    w1t = w1.T                     # (D, D)
    w2t = w2.T                     # (D, N)
    w3t = w3.T                     # (D, N)
    b1r = b1.reshape(1, d_model)
    b2r = b2.reshape(1, n_state)
    b3r = b3.reshape(1, n_state)

    itemsize = jnp.dtype(x.dtype).itemsize
    bytes_accessed = itemsize * (2 * m_pad * d_model            # x in, y out
                                 + d_model * d_model + 2 * d_model * n_state
                                 + d_model + 2 * n_state)
    flops = 2 * m_pad * d_model * (d_model + 2 * n_state) \
        + 6 * m_pad * d_model + 2 * m_pad * n_state

    out = pl.pallas_call(
        _s6_kernel,
        out_shape=jax.ShapeDtypeStruct((m_pad, d_model), x.dtype),
        grid=(m_pad // tm,),
        in_specs=[
            pl.BlockSpec((tm, d_model), lambda i: (i, 0)),        # x rows
            pl.BlockSpec((d_model, d_model), lambda i: (0, 0)),   # W1^T (resident)
            pl.BlockSpec((1, d_model), lambda i: (0, 0)),         # b1
            pl.BlockSpec((d_model, n_state), lambda i: (0, 0)),   # W2^T
            pl.BlockSpec((1, n_state), lambda i: (0, 0)),         # b2
            pl.BlockSpec((d_model, n_state), lambda i: (0, 0)),   # W3^T
            pl.BlockSpec((1, n_state), lambda i: (0, 0)),         # b3
        ],
        out_specs=pl.BlockSpec((tm, d_model), lambda i: (i, 0)),
        compiler_params=pltpu.CompilerParams(
            dimension_semantics=("parallel",)),
        cost_estimate=pl.CostEstimate(
            flops=flops,
            transcendentals=2 * m_pad * d_model,
            bytes_accessed=bytes_accessed),
    )(x2, w1t, b1r, w2t, b2r, w3t, b3r)

    return out[:m].reshape(bsz, seq_len, d_model)


def s6_ref(x, w1, b1, w2, b2, w3, b3):
    """Faithful (un-simplified) reference mirroring the PyTorch forward."""
    b_mat = x @ w2.T + b2
    c_mat = x @ w3.T + b3
    delta = jax.nn.softplus(x @ w1.T + b1)
    dB = jnp.einsum('bld,bln->bldn', delta, b_mat)
    h = x[..., None] * dB            # dA * zeros(h) == 0, so dA drops out
    return jnp.einsum('bln,bldn->bld', c_mat, h)


if __name__ == "__main__":
    key = jax.random.PRNGKey(0)
    batch, seq_len, d_model, state_size = 2, 16, 32, 64
    ks = jax.random.split(key, 7)

    x = jax.random.normal(ks[0], (batch, seq_len, d_model), dtype=jnp.float32)
    w1 = jax.random.normal(ks[1], (d_model, d_model), jnp.float32) / jnp.sqrt(d_model)
    b1 = 0.1 * jax.random.normal(ks[2], (d_model,), jnp.float32)
    w2 = jax.random.normal(ks[3], (state_size, d_model), jnp.float32) / jnp.sqrt(d_model)
    b2 = 0.1 * jax.random.normal(ks[4], (state_size,), jnp.float32)
    w3 = jax.random.normal(ks[5], (state_size, d_model), jnp.float32) / jnp.sqrt(d_model)
    b3 = 0.1 * jax.random.normal(ks[6], (state_size,), jnp.float32)

    y = s6_forward(x, w1, b1, w2, b2, w3, b3)
    y = jax.block_until_ready(y)

    y_ref = s6_ref(x, w1, b1, w2, b2, w3, b3)
    assert y.shape == (batch, seq_len, d_model)
    assert jnp.allclose(y, y_ref, rtol=1e-4, atol=1e-4), \
        float(jnp.max(jnp.abs(y - y_ref)))

    print("KERNEL_OK")
</pallas_src>

<mosaic_0001>
module attributes {stable_mosaic.version = 11 : i64} {
  func.func @_s6_kernel(%arg0: i32, %arg1: memref<32x32xf32, #tpu.memory_space<vmem>>, %arg2: memref<32x32xf32, #tpu.memory_space<vmem>>, %arg3: memref<1x32xf32, #tpu.memory_space<vmem>>, %arg4: memref<32x64xf32, #tpu.memory_space<vmem>>, %arg5: memref<1x64xf32, #tpu.memory_space<vmem>>, %arg6: memref<32x64xf32, #tpu.memory_space<vmem>>, %arg7: memref<1x64xf32, #tpu.memory_space<vmem>>, %arg8: memref<32x32xf32, #tpu.memory_space<vmem>>) attributes {dimension_semantics = [#tpu.dimension_semantics<parallel>], iteration_bounds = array<i64: 1>, scalar_prefetch = 0 : i64, scratch_operands = 0 : i64, tpu.core_type = #tpu.core_type<tc>, window_params = [{transform_indices = @transform_0, window_bounds = array<i64: 32, 32>}, {pipeline_mode = #tpu.pipeline_mode<synchronous>, transform_indices = @transform_1, window_bounds = array<i64: 32, 32>}, {pipeline_mode = #tpu.pipeline_mode<synchronous>, transform_indices = @transform_2, window_bounds = array<i64: 1, 32>}, {pipeline_mode = #tpu.pipeline_mode<synchronous>, transform_indices = @transform_3, window_bounds = array<i64: 32, 64>}, {pipeline_mode = #tpu.pipeline_mode<synchronous>, transform_indices = @transform_4, window_bounds = array<i64: 1, 64>}, {pipeline_mode = #tpu.pipeline_mode<synchronous>, transform_indices = @transform_5, window_bounds = array<i64: 32, 64>}, {pipeline_mode = #tpu.pipeline_mode<synchronous>, transform_indices = @transform_6, window_bounds = array<i64: 1, 64>}, {transform_indices = @transform_7, window_bounds = array<i64: 32, 32>}]} {
    %c0 = arith.constant 0 : index
    %c0_0 = arith.constant 0 : index
    %0 = vector.load %arg1[%c0, %c0_0] : memref<32x32xf32, #tpu.memory_space<vmem>>, vector<32x32xf32>
    %c0_1 = arith.constant 0 : index
    %c0_2 = arith.constant 0 : index
    %1 = vector.load %arg2[%c0_1, %c0_2] : memref<32x32xf32, #tpu.memory_space<vmem>>, vector<32x32xf32>
    %cst = arith.constant dense<0.000000e+00> : vector<32x32xf32>
    %2 = tpu.matmul %0, %1, %cst {dimension_numbers = #tpu.dot_dimension_numbers<[1], [0], [0], [1], [0, 0, 1, 1], [], []>} : vector<32x32xf32>, vector<32x32xf32>, vector<32x32xf32> -> vector<32x32xf32>
    %c0_3 = arith.constant 0 : index
    %c0_4 = arith.constant 0 : index
    %3 = vector.load %arg3[%c0_3, %c0_4] : memref<1x32xf32, #tpu.memory_space<vmem>>, vector<1x32xf32>
    %4 = vector.broadcast %3 : vector<1x32xf32> to vector<32x32xf32>
    %5 = arith.addf %2, %4 : vector<32x32xf32>
    %cst_5 = arith.constant 0.000000e+00 : f32
    %6 = vector.broadcast %cst_5 : f32 to vector<32x32xf32>
    %7 = arith.maximumf %5, %6 : vector<32x32xf32>
    %8 = math.absf %5 : vector<32x32xf32>
    %cst_6 = arith.constant 0.000000e+00 : f32
    %9 = vector.broadcast %cst_6 : f32 to vector<32x32xf32>
    %10 = arith.subf %9, %8 : vector<32x32xf32>
    %11 = math.exp %10 : vector<32x32xf32>
    %cst_7 = arith.constant 1.000000e+00 : f32
    %12 = vector.broadcast %cst_7 : f32 to vector<32x32xf32>
    %13 = arith.addf %12, %11 : vector<32x32xf32>
    %14 = math.log %13 : vector<32x32xf32>
    %15 = arith.addf %7, %14 : vector<32x32xf32>
    %c0_8 = arith.constant 0 : index
    %c0_9 = arith.constant 0 : index
    %16 = vector.load %arg4[%c0_8, %c0_9] : memref<32x64xf32, #tpu.memory_space<vmem>>, vector<32x64xf32>
    %cst_10 = arith.constant dense<0.000000e+00> : vector<32x64xf32>
    %17 = tpu.matmul %0, %16, %cst_10 {dimension_numbers = #tpu.dot_dimension_numbers<[1], [0], [0], [1], [0, 0, 1, 1], [], []>} : vector<32x32xf32>, vector<32x64xf32>, vector<32x64xf32> -> vector<32x64xf32>
    %c0_11 = arith.constant 0 : index
    %c0_12 = arith.constant 0 : index
    %18 = vector.load %arg5[%c0_11, %c0_12] : memref<1x64xf32, #tpu.memory_space<vmem>>, vector<1x64xf32>
    %19 = vector.broadcast %18 : vector<1x64xf32> to vector<32x64xf32>
    %20 = arith.addf %17, %19 : vector<32x64xf32>
    %c0_13 = arith.constant 0 : index
    %c0_14 = arith.constant 0 : index
    %21 = vector.load %arg6[%c0_13, %c0_14] : memref<32x64xf32, #tpu.memory_space<vmem>>, vector<32x64xf32>
    %cst_15 = arith.constant dense<0.000000e+00> : vector<32x64xf32>
    %22 = tpu.matmul %0, %21, %cst_15 {dimension_numbers = #tpu.dot_dimension_numbers<[1], [0], [0], [1], [0, 0, 1, 1], [], []>} : vector<32x32xf32>, vector<32x64xf32>, vector<32x64xf32> -> vector<32x64xf32>
    %c0_16 = arith.constant 0 : index
    %c0_17 = arith.constant 0 : index
    %23 = vector.load %arg7[%c0_16, %c0_17] : memref<1x64xf32, #tpu.memory_space<vmem>>, vector<1x64xf32>
    %24 = vector.broadcast %23 : vector<1x64xf32> to vector<32x64xf32>
    %25 = arith.addf %22, %24 : vector<32x64xf32>
    %26 = arith.mulf %20, %25 : vector<32x64xf32>
    %cst_18 = arith.constant dense<0.000000e+00> : vector<32xf32>
    %27 = vector.multi_reduction <add>, %26, %cst_18 [1] : vector<32x64xf32> to vector<32xf32>
    %28 = vector.shape_cast %27 : vector<32xf32> to vector<32x1xf32>
    %29 = arith.mulf %0, %15 : vector<32x32xf32>
    %30 = vector.broadcast %28 : vector<32x1xf32> to vector<32x32xf32>
    %31 = arith.mulf %29, %30 : vector<32x32xf32>
    %c0_19 = arith.constant 0 : index
    %c0_20 = arith.constant 0 : index
    %32 = vector.load %arg8[%c0_19, %c0_20] : memref<32x32xf32, #tpu.memory_space<vmem>>, vector<32x32xf32>
    tpu.vector_store %arg8[%c0_19, %c0_20], %31 {strides = array<i32>} : memref<32x32xf32, #tpu.memory_space<vmem>>, vector<32x32xf32>,
    return
  }
  func.func @transform_0(%arg0: i32) -> (i32, i32) {
    %c0_i32 = arith.constant 0 : i32
    %c0_i32_0 = arith.constant 0 : i32
    return %arg0, %c0_i32 : i32, i32
  }
  func.func @transform_1(%arg0: i32) -> (i32, i32) {
    %c0_i32 = arith.constant 0 : i32
    %c0_i32_0 = arith.constant 0 : i32
    %c0_i32_1 = arith.constant 0 : i32
    return %c0_i32, %c0_i32_0 : i32, i32
  }
  func.func @transform_2(%arg0: i32) -> (i32, i32) {
    %c0_i32 = arith.constant 0 : i32
    %c0_i32_0 = arith.constant 0 : i32
    %c0_i32_1 = arith.constant 0 : i32
    return %c0_i32, %c0_i32_0 : i32, i32
  }
  func.func @transform_3(%arg0: i32) -> (i32, i32) {
    %c0_i32 = arith.constant 0 : i32
    %c0_i32_0 = arith.constant 0 : i32
    %c0_i32_1 = arith.constant 0 : i32
    return %c0_i32, %c0_i32_0 : i32, i32
  }
  func.func @transform_4(%arg0: i32) -> (i32, i32) {
    %c0_i32 = arith.constant 0 : i32
    %c0_i32_0 = arith.constant 0 : i32
    %c0_i32_1 = arith.constant 0 : i32
    return %c0_i32, %c0_i32_0 : i32, i32
  }
  func.func @transform_5(%arg0: i32) -> (i32, i32) {
    %c0_i32 = arith.constant 0 : i32
    %c0_i32_0 = arith.constant 0 : i32
    %c0_i32_1 = arith.constant 0 : i32
    return %c0_i32, %c0_i32_0 : i32, i32
  }
  func.func @transform_6(%arg0: i32) -> (i32, i32) {
    %c0_i32 = arith.constant 0 : i32
    %c0_i32_0 = arith.constant 0 : i32
    %c0_i32_1 = arith.constant 0 : i32
    return %c0_i32, %c0_i32_0 : i32, i32
  }
  func.func @transform_7(%arg0: i32) -> (i32, i32) {
    %c0_i32 = arith.constant 0 : i32
    %c0_i32_0 = arith.constant 0 : i32
    return %arg0, %c0_i32 : i32, i32
  }
}

</mosaic_0001>

<llo_original>
// kernel: tpu_custom_call.1
$region0: #{tpu_custom_call.1}
  #allocation0 [shape = 'u32[]', space=smem, size = 0x4, offset = 0x4, fixed_abs, tag = 'smem constant byte address 0x4 - core index']
  #allocation1 [shape = 'u32[144,128]{1,0:T(1,128)}', space=vmem, size = 0x12000, scoped, tag = 'internal scratch']
  %s0 = inlined_call_operand.hbm [shape: f32[32,32], index: 0, kind: input, shape index: {}]
  %s1 = inlined_call_operand.hbm [shape: f32[32,32], index: 1, kind: input, shape index: {}]
  %s2 = inlined_call_operand.vmem [shape: f32[1,32], index: 2, kind: input, shape index: {}]
  %s3 = inlined_call_operand.hbm [shape: f32[32,64], index: 3, kind: input, shape index: {}]
  %s4 = inlined_call_operand.vmem [shape: f32[1,64], index: 4, kind: input, shape index: {}]
  %s5 = inlined_call_operand.hbm [shape: f32[32,64], index: 5, kind: input, shape index: {}]
  %s6 = inlined_call_operand.vmem [shape: f32[1,64], index: 6, kind: input, shape index: {}]
  %s7 = inlined_call_operand.hbm [shape: f32[32,32], index: 7, kind: output, shape index: {}]
  %s8 = sld [smem:[#allocation0]]
  $region54: #{tpu_custom_call.1} parent=0
    _
  %s10 = ssub.s32 1, %s8
  %s11 = scalar_select 0, %s10, %s8
  $region1: #{tpu_custom_call.1} parent=0
    #allocation2 [shape = 'u8[16384]{0}', space=vmem, size = 0x4000, scoped, tag = 'input window, operand 0, single buffered']
    #allocation3 [shape = 's32[1]{0}', space=sflag, size = 0x4, scoped, tag = 'scoped memory for tpu_custom_call.1']
    #allocation4 [shape = 's32[1]{0}', space=sflag, size = 0x4, scoped, tag = 'scoped memory for tpu_custom_call.1']
    #allocation5 [shape = 'u8[16384]{0}', space=vmem, size = 0x4000, scoped, tag = 'input window, operand 1, single buffered']
    #allocation6 [shape = 's32[1]{0}', space=sflag, size = 0x4, scoped, tag = 'scoped memory for tpu_custom_call.1']
    #allocation7 [shape = 'u8[16384]{0}', space=vmem, size = 0x4000, scoped, tag = 'input window, operand 3, single buffered']
    #allocation8 [shape = 'u8[16384]{0}', space=vmem, size = 0x4000, scoped, tag = 'input window, operand 5, single buffered']
    #allocation9 [shape = 's32[1]{0}', space=sflag, size = 0x4, scoped, tag = 'scoped memory for tpu_custom_call.1']
    #allocation10 [shape = 'u8[16384]{0}', space=vmem, size = 0x4000, scoped, tag = 'output window, operand 0, single buffered']
    %12 = vsyncpa [#allocation3], 0
    %13 = vsyncpa [#allocation6], 0
    %14 = vsyncpa [#allocation9], 0
    %15 = vsyncpa [#allocation4], 0
    // Predicated region
    $region2: #{tpu_custom_call.1} parent=1 // pred_check
      _
    $region3: #{tpu_custom_call.1} parent=1 // pred_check_branch
      %17 = sbr.rel (0) target = $region5
    $region4: #{tpu_custom_call.1} parent=1 // pred_region
      %s19 = ssub.s32 512, 512
      %20 = vsyncadd [#allocation3], %s19
      %s21 = sshll.u32 [#allocation2], 4
      %s22 = int_to_ptr.vmem [resolvable:$true] %s21
      %27 = dma.hbm_to_vmem [thread:$0]  %s0, 512, %s22, [#allocation3], 128, 128, 8
    $region5: #{tpu_custom_call.1} parent=1 // pred_fallthru
      _
    // Predicated region
    $region6: #{tpu_custom_call.1} parent=1 // pred_check
      _
    $region7: #{tpu_custom_call.1} parent=1 // pred_check_branch
      %29 = sbr.rel (0) target = $region9
    $region8: #{tpu_custom_call.1} parent=1 // pred_region
      %s31 = ssub.s32 512, 512
      %32 = vsyncadd [#allocation6], %s31
      %s33 = sshll.u32 [#allocation5], 4
      %s34 = int_to_ptr.vmem [resolvable:$true] %s33
      %39 = dma.hbm_to_vmem [thread:$0]  %s1, 512, %s34, [#allocation6], 128, 128, 8
    $region9: #{tpu_custom_call.1} parent=1 // pred_fallthru
      _
    // Predicated region
    $region10: #{tpu_custom_call.1} parent=1 // pred_check
      _
    $region11: #{tpu_custom_call.1} parent=1 // pred_check_branch
      %41 = sbr.rel (0) target = $region13
    $region12: #{tpu_custom_call.1} parent=1 // pred_region
      _
    $region13: #{tpu_custom_call.1} parent=1 // pred_fallthru
      _
    // Predicated region
    $region14: #{tpu_custom_call.1} parent=1 // pred_check
      _
    $region15: #{tpu_custom_call.1} parent=1 // pred_check_branch
      %43 = sbr.rel (0) target = $region17
    $region16: #{tpu_custom_call.1} parent=1 // pred_region
      %s45 = ssub.s32 512, 512
      %46 = vsyncadd [#allocation6], %s45
      %s47 = sshll.u32 [#allocation7], 4
      %s48 = int_to_ptr.vmem [resolvable:$true] %s47
      %53 = dma.hbm_to_vmem [thread:$0]  %s3, 512, %s48, [#allocation6], 128, 128, 8
    $region17: #{tpu_custom_call.1} parent=1 // pred_fallthru
      _
    // Predicated region
    $region18: #{tpu_custom_call.1} parent=1 // pred_check
      _
    $region19: #{tpu_custom_call.1} parent=1 // pred_check_branch
      %55 = sbr.rel (0) target = $region21
    $region20: #{tpu_custom_call.1} parent=1 // pred_region
      _
    $region21: #{tpu_custom_call.1} parent=1 // pred_fallthru
      _
    // Predicated region
    $region22: #{tpu_custom_call.1} parent=1 // pred_check
      _
    $region23: #{tpu_custom_call.1} parent=1 // pred_check_branch
      %57 = sbr.rel (0) target = $region25
    $region24: #{tpu_custom_call.1} parent=1 // pred_region
      %s59 = ssub.s32 512, 512
      %60 = vsyncadd [#allocation9], %s59
      %s61 = sshll.u32 [#allocation8], 4
      %s62 = int_to_ptr.vmem [resolvable:$true] %s61
      %67 = dma.hbm_to_vmem [thread:$0]  %s5, 512, %s62, [#allocation9], 128, 128, 8
    $region25: #{tpu_custom_call.1} parent=1 // pred_fallthru
      _
    // Predicated region
    $region26: #{tpu_custom_call.1} parent=1 // pred_check
      _
    $region27: #{tpu_custom_call.1} parent=1 // pred_check_branch
      %69 = sbr.rel (0) target = $region29
    $region28: #{tpu_custom_call.1} parent=1 // pred_region
      _
    $region29: #{tpu_custom_call.1} parent=1 // pred_fallthru
      _
    // Predicated region
    $region30: #{tpu_custom_call.1} parent=1 // pred_check
      _
    $region31: #{tpu_custom_call.1} parent=1 // pred_check_branch
      %71 = sbr.rel (0) target = $region33
    $region32: #{tpu_custom_call.1} parent=1 // pred_region
      %72 = dma.done [#allocation3], 512
    $region33: #{tpu_custom_call.1} parent=1 // pred_fallthru
      _
    // Predicated region
    $region34: #{tpu_custom_call.1} parent=1 // pred_check
      _
    $region35: #{tpu_custom_call.1} parent=1 // pred_check_branch
      %74 = sbr.rel (0) target = $region37
    $region36: #{tpu_custom_call.1} parent=1 // pred_region
      %75 = dma.done [#allocation6], 512
    $region37: #{tpu_custom_call.1} parent=1 // pred_fallthru
      _
    // Predicated region
    $region38: #{tpu_custom_call.1} parent=1 // pred_check
      _
    $region39: #{tpu_custom_call.1} parent=1 // pred_check_branch
      %77 = sbr.rel (0) target = $region41
    $region40: #{tpu_custom_call.1} parent=1 // pred_region
      %78 = dma.done [#allocation6], 512
    $region41: #{tpu_custom_call.1} parent=1 // pred_fallthru
      _
    // Predicated region
    $region42: #{tpu_custom_call.1} parent=1 // pred_check
      _
    $region43: #{tpu_custom_call.1} parent=1 // pred_check_branch
      %80 = sbr.rel (0) target = $region45
    $region44: #{tpu_custom_call.1} parent=1 // pred_region
      %81 = dma.done [#allocation9], 512
    $region45: #{tpu_custom_call.1} parent=1 // pred_fallthru
      _
    %v82 = vld [vmem:[#allocation2] sm:$0xff]
    %v83 = vld [vmem:[#allocation2 + $0x8] sm:$0xff]
    %v84 = vld [vmem:[#allocation2 + $0x10] sm:$0xff]
    %v85 = vld [vmem:[#allocation2 + $0x18] sm:$0xff]
    %v86 = vld [vmem:[#allocation5] sm:$0xff]
    %v87 = vld [vmem:[#allocation5 + $0x8] sm:$0xff]
    %v88 = vld [vmem:[#allocation5 + $0x10] sm:$0xff]
    %v89 = vld [vmem:[#allocation5 + $0x18] sm:$0xff]
    %v90 = vld [vmem:[%s2] sm:$0x1]
    %v92 = vlaneseq
    %v93 = vshrl.u32 %v92, 7
    %v94 = vsub.s32 0, %v93
    %v95 = vrot.slane %v90, %v94
    %vm97 = vcmask 261120
    %v99 = vsel %vm97, %v82, 0
    %v102 = vsel %vm97, %v83, 0
    %v105 = vsel %vm97, %v84, 0
    %v108 = vsel %vm97, %v85, 0
    %110 = vmatprep.subr.mxu0 0.0
    %111 = vmatpush1.msra.mxu0 %v86
    %112 = vmatprep.subr.mxu0 0.0
    %113 = vmatpush1.msra.mxu0 %v87
    %114 = vmatprep.subr.mxu0 0.0
    %115 = vmatpush1.msra.mxu0 %v88
    %116 = vmatprep.subr.mxu0 0.0
    %117 = vmatpush1.msra.mxu0 %v89
    %118 = vmatprep.subr.mxu0 0.0
    %119 = vmatpush1.msra.mxu0 0.0
    %120 = vmatprep.subr.mxu0 0.0
    %121 = vmatpush1.msra.mxu0 0.0
    %122 = vmatprep.subr.mxu0 0.0
    %123 = vmatpush1.msra.mxu0 0.0
    %124 = vmatprep.subr.mxu0 0.0
    %125 = vmatpush1.msra.mxu0 0.0
    %126 = vmatprep.subr.mxu0 0.0
    %127 = vmatpush1.msra.mxu0 0.0
    %128 = vmatprep.subr.mxu0 0.0
    %129 = vmatpush1.msra.mxu0 0.0
    %130 = vmatprep.subr.mxu0 0.0
    %131 = vmatpush1.msra.mxu0 0.0
    %132 = vmatprep.subr.mxu0 0.0
    %133 = vmatpush1.msra.mxu0 0.0
    %134 = vmatprep.subr.mxu0 0.0
    %135 = vmatpush1.msra.mxu0 0.0
    %136 = vmatprep.subr.mxu0 0.0
    %137 = vmatpush1.msra.mxu0 0.0
    %138 = vmatprep.subr.mxu0 0.0
    %139 = vmatpush1.msra.mxu0 0.0
    %140 = vmatprep.subr.mxu0 0.0
    %141 = vmatpush1.msra.mxu0 0.0
    %142 = vmatprep.subr.mxu0 0.0
    %143 = vmatpush1.msra.mxu0 0.0
    %144 = vmatprep.subr.mxu0 0.0
    %145 = vmatpush1.msra.mxu0 0.0
    %146 = vmatprep.subr.mxu0 0.0
    %147 = vmatpush1.msra.mxu0 0.0
    %148 = vmatprep.subr.mxu0 0.0
    %149 = vmatpush1.msra.mxu0 0.0
    %150 = vmatprep.subr.mxu0 0.0
    %151 = vmatpush1.msra.mxu0 0.0
    %152 = vmatprep.subr.mxu0 0.0
    %153 = vmatpush1.msra.mxu0 0.0
    %154 = vmatprep.subr.mxu0 0.0
    %155 = vmatpush1.msra.mxu0 0.0
    %156 = vmatprep.subr.mxu0 0.0
    %157 = vmatpush1.msra.mxu0 0.0
    %158 = vmatprep.subr.mxu0 0.0
    %159 = vmatpush1.msra.mxu0 0.0
    %160 = vmatprep.subr.mxu0 0.0
    %161 = vmatpush1.msra.mxu0 0.0
    %162 = vmatprep.subr.mxu0 0.0
    %163 = vmatpush1.msra.mxu0 0.0
    %164 = vmatprep.subr.mxu0 0.0
    %165 = vmatpush1.msra.mxu0 0.0
    %166 = vmatprep.subr.mxu0 0.0
    %167 = vmatpush1.msra.mxu0 0.0
    %168 = vmatprep.subr.mxu0 0.0
    %169 = vmatpush1.msra.mxu0 0.0
    %170 = vmatprep.subr.mxu0 0.0
    %171 = vmatpush1.msra.mxu0 0.0
    %172 = vmatprep.subr.mxu0 0.0
    %173 = vmatpush1.msra.mxu0 0.0
    %174 = vmatprep.mubr.f32.mxu0 0.0
    %175 = vmatmul.mubr.f32.gmra.mrb[0].mxu0 %v99
    %v176 = vpop.f32.mrb[0].mxu0
    %v177 = vadd.f32 %v95, %v176
    %v178 = vpop.f32.mrb[0].mxu0
    %179 = vmatprep.mubr.f32.mxu0 0.0
    %180 = vmatmul.mubr.f32.gmra.mrb[0].mxu0 %v102
    %v181 = vpop.f32.mrb[0].mxu0
    %v182 = vadd.f32 %v95, %v181
    %v183 = vpop.f32.mrb[0].mxu0
    %184 = vmatprep.mubr.f32.mxu0 0.0
    %185 = vmatmul.mubr.f32.gmra.mrb[0].mxu0 %v105
    %v186 = vpop.f32.mrb[0].mxu0
    %v187 = vadd.f32 %v95, %v186
    %v188 = vpop.f32.mrb[0].mxu0
    %189 = vmatprep.mubr.f32.mxu0 0.0
    %190 = vmatmul.mubr.f32.gmra.mrb[0].mxu0 %v108
    %v191 = vpop.f32.mrb[0].mxu0
    %v192 = vadd.f32 %v95, %v191
    %v193 = vpop.f32.mrb[0].mxu0
    %194 = vdwg.mxu0
    %v195 = vmax.f32 %v177, 0.0
    %v196 = vmax.f32 %v182, 0.0
    %v197 = vmax.f32 %v187, 0.0
    %v198 = vmax.f32 %v192, 0.0
    %v199 = vand.u32 2147483647, %v177
    %v200 = vand.u32 2147483647, %v182
    %v201 = vand.u32 2147483647, %v187
    %v202 = vand.u32 2147483647, %v192
    %v203 = vsub.f32 0.0, %v199
    %v204 = vsub.f32 0.0, %v200
    %v205 = vsub.f32 0.0, %v201
    %v206 = vsub.f32 0.0, %v202
    %v207 = vmul.f32 %v203, 1.442695
    %v208 = vpow.pop %v207
    %v209 = vmul.f32 %v204, 1.442695
    %v210 = vpow.pop %v209
    %v211 = vmul.f32 %v205, 1.442695
    %v212 = vpow.pop %v211
    %v213 = vmul.f32 %v206, 1.442695
    %v214 = vpow.pop %v213
    %v215 = vadd.f32 %v208, 1.0
    %v216 = vadd.f32 %v210, 1.0
    %v217 = vadd.f32 %v212, 1.0
    %v218 = vadd.f32 %v214, 1.0
    %v219 = vlog2.pop %v215
    %v220 = vmul.f32 %v219, 0.6931472
    %v221 = vlog2.pop %v216
    %v222 = vmul.f32 %v221, 0.6931472
    %v223 = vlog2.pop %v217
    %v224 = vmul.f32 %v223, 0.6931472
    %v225 = vlog2.pop %v218
    %v226 = vmul.f32 %v225, 0.6931472
    %v227 = vadd.f32 %v195, %v220
    %v228 = vadd.f32 %v196, %v222
    %v229 = vadd.f32 %v197, %v224
    %v230 = vadd.f32 %v198, %v226
    %v231 = vld [vmem:[#allocation7] sm:$0xff]
    %v232 = vld [vmem:[#allocation7 + $0x8] sm:$0xff]
    %v233 = vld [vmem:[#allocation7 + $0x10] sm:$0xff]
    %v234 = vld [vmem:[#allocation7 + $0x18] sm:$0xff]
    %v235 = vld [vmem:[%s4] sm:$0x1]
    %v237 = vlaneseq
    %v238 = vshrl.u32 %v237, 7
    %v239 = vsub.s32 0, %v238
    %v240 = vrot.slane %v235, %v239
    %242 = vmatprep.subr.mxu0 0.0
    %243 = vmatpush1.msra.mxu0 %v231
    %244 = vmatprep.subr.mxu0 0.0
    %245 = vmatpush1.msra.mxu0 %v232
    %246 = vmatprep.subr.mxu0 0.0
    %247 = vmatpush1.msra.mxu0 %v233
    %248 = vmatprep.subr.mxu0 0.0
    %249 = vmatpush1.msra.mxu0 %v234
    %250 = vmatprep.subr.mxu0 0.0
    %251 = vmatpush1.msra.mxu0 0.0
    %252 = vmatprep.subr.mxu0 0.0
    %253 = vmatpush1.msra.mxu0 0.0
    %254 = vmatprep.subr.mxu0 0.0
    %255 = vmatpush1.msra.mxu0 0.0
    %256 = vmatprep.subr.mxu0 0.0
    %257 = vmatpush1.msra.mxu0 0.0
    %258 = vmatprep.subr.mxu0 0.0
    %259 = vmatpush1.msra.mxu0 0.0
    %260 = vmatprep.subr.mxu0 0.0
    %261 = vmatpush1.msra.mxu0 0.0
    %262 = vmatprep.subr.mxu0 0.0
    %263 = vmatpush1.msra.mxu0 0.0
    %264 = vmatprep.subr.mxu0 0.0
    %265 = vmatpush1.msra.mxu0 0.0
    %266 = vmatprep.subr.mxu0 0.0
    %267 = vmatpush1.msra.mxu0 0.0
    %268 = vmatprep.subr.mxu0 0.0
    %269 = vmatpush1.msra.mxu0 0.0
    %270 = vmatprep.subr.mxu0 0.0
    %271 = vmatpush1.msra.mxu0 0.0
    %272 = vmatprep.subr.mxu0 0.0
    %273 = vmatpush1.msra.mxu0 0.0
    %274 = vmatprep.subr.mxu0 0.0
    %275 = vmatpush1.msra.mxu0 0.0
    %276 = vmatprep.subr.mxu0 0.0
    %277 = vmatpush1.msra.mxu0 0.0
    %278 = vmatprep.subr.mxu0 0.0
    %279 = vmatpush1.msra.mxu0 0.0
    %280 = vmatprep.subr.mxu0 0.0
    %281 = vmatpush1.msra.mxu0 0.0
    %282 = vmatprep.subr.mxu0 0.0
    %283 = vmatpush1.msra.mxu0 0.0
    %284 = vmatprep.subr.mxu0 0.0
    %285 = vmatpush1.msra.mxu0 0.0
    %286 = vmatprep.subr.mxu0 0.0
    %287 = vmatpush1.msra.mxu0 0.0
    %288 = vmatprep.subr.mxu0 0.0
    %289 = vmatpush1.msra.mxu0 0.0
    %290 = vmatprep.subr.mxu0 0.0
    %291 = vmatpush1.msra.mxu0 0.0
    %292 = vmatprep.subr.mxu0 0.0
    %293 = vmatpush1.msra.mxu0 0.0
    %294 = vmatprep.subr.mxu0 0.0
    %295 = vmatpush1.msra.mxu0 0.0
    %296 = vmatprep.subr.mxu0 0.0
    %297 = vmatpush1.msra.mxu0 0.0
    %298 = vmatprep.subr.mxu0 0.0
    %299 = vmatpush1.msra.mxu0 0.0
    %300 = vmatprep.subr.mxu0 0.0
    %301 = vmatpush1.msra.mxu0 0.0
    %302 = vmatprep.subr.mxu0 0.0
    %303 = vmatpush1.msra.mxu0 0.0
    %304 = vmatprep.subr.mxu0 0.0
    %305 = vmatpush1.msra.mxu0 0.0
    %306 = vmatprep.mubr.f32.mxu0 0.0
    %307 = vmatmul.mubr.f32.gmra.mrb[0].mxu0 %v99
    %v308 = vpop.f32.mrb[0].mxu0
    %v309 = vadd.f32 %v240, %v308
    %v310 = vpop.f32.mrb[0].mxu0
    %311 = vmatprep.mubr.f32.mxu0 0.0
    %312 = vmatmul.mubr.f32.gmra.mrb[0].mxu0 %v102
    %v313 = vpop.f32.mrb[0].mxu0
    %v314 = vadd.f32 %v240, %v313
    %v315 = vpop.f32.mrb[0].mxu0
    %316 = vmatprep.mubr.f32.mxu0 0.0
    %317 = vmatmul.mubr.f32.gmra.mrb[0].mxu0 %v105
    %v318 = vpop.f32.mrb[0].mxu0
    %v319 = vadd.f32 %v240, %v318
    %v320 = vpop.f32.mrb[0].mxu0
    %321 = vmatprep.mubr.f32.mxu0 0.0
    %322 = vmatmul.mubr.f32.gmra.mrb[0].mxu0 %v108
    %v323 = vpop.f32.mrb[0].mxu0
    %v324 = vadd.f32 %v240, %v323
    %v325 = vpop.f32.mrb[0].mxu0
    %326 = vdwg.mxu0
    %v327 = vld [vmem:[#allocation8] sm:$0xff]
    %v328 = vld [vmem:[#allocation8 + $0x8] sm:$0xff]
    %v329 = vld [vmem:[#allocation8 + $0x10] sm:$0xff]
    %v330 = vld [vmem:[#allocation8 + $0x18] sm:$0xff]
    %v331 = vld [vmem:[%s6] sm:$0x1]
    %v333 = vlaneseq
    %v334 = vshrl.u32 %v333, 7
    %v335 = vsub.s32 0, %v334
    %v336 = vrot.slane %v331, %v335
    %338 = vmatprep.subr.mxu0 0.0
    %339 = vmatpush1.msra.mxu0 %v327
    %340 = vmatprep.subr.mxu0 0.0
    %341 = vmatpush1.msra.mxu0 %v328
    %342 = vmatprep.subr.mxu0 0.0
    %343 = vmatpush1.msra.mxu0 %v329
    %344 = vmatprep.subr.mxu0 0.0
    %345 = vmatpush1.msra.mxu0 %v330
    %346 = vmatprep.subr.mxu0 0.0
    %347 = vmatpush1.msra.mxu0 0.0
    %348 = vmatprep.subr.mxu0 0.0
    %349 = vmatpush1.msra.mxu0 0.0
    %350 = vmatprep.subr.mxu0 0.0
    %351 = vmatpush1.msra.mxu0 0.0
    %352 = vmatprep.subr.mxu0 0.0
    %353 = vmatpush1.msra.mxu0 0.0
    %354 = vmatprep.subr.mxu0 0.0
    %355 = vmatpush1.msra.mxu0 0.0
    %356 = vmatprep.subr.mxu0 0.0
    %357 = vmatpush1.msra.mxu0 0.0
    %358 = vmatprep.subr.mxu0 0.0
    %359 = vmatpush1.msra.mxu0 0.0
    %360 = vmatprep.subr.mxu0 0.0
    %361 = vmatpush1.msra.mxu0 0.0
    %362 = vmatprep.subr.mxu0 0.0
    %363 = vmatpush1.msra.mxu0 0.0
    %364 = vmatprep.subr.mxu0 0.0
    %365 = vmatpush1.msra.mxu0 0.0
    %366 = vmatprep.subr.mxu0 0.0
    %367 = vmatpush1.msra.mxu0 0.0
    %368 = vmatprep.subr.mxu0 0.0
    %369 = vmatpush1.msra.mxu0 0.0
    %370 = vmatprep.subr.mxu0 0.0
    %371 = vmatpush1.msra.mxu0 0.0
    %372 = vmatprep.subr.mxu0 0.0
    %373 = vmatpush1.msra.mxu0 0.0
    %374 = vmatprep.subr.mxu0 0.0
    %375 = vmatpush1.msra.mxu0 0.0
    %376 = vmatprep.subr.mxu0 0.0
    %377 = vmatpush1.msra.mxu0 0.0
    %378 = vmatprep.subr.mxu0 0.0
    %379 = vmatpush1.msra.mxu0 0.0
    %380 = vmatprep.subr.mxu0 0.0
    %381 = vmatpush1.msra.mxu0 0.0
    %382 = vmatprep.subr.mxu0 0.0
    %383 = vmatpush1.msra.mxu0 0.0
    %384 = vmatprep.subr.mxu0 0.0
    %385 = vmatpush1.msra.mxu0 0.0
    %386 = vmatprep.subr.mxu0 0.0
    %387 = vmatpush1.msra.mxu0 0.0
    %388 = vmatprep.subr.mxu0 0.0
    %389 = vmatpush1.msra.mxu0 0.0
    %390 = vmatprep.subr.mxu0 0.0
    %391 = vmatpush1.msra.mxu0 0.0
    %392 = vmatprep.subr.mxu0 0.0
    %393 = vmatpush1.msra.mxu0 0.0
    %394 = vmatprep.subr.mxu0 0.0
    %395 = vmatpush1.msra.mxu0 0.0
    %396 = vmatprep.subr.mxu0 0.0
    %397 = vmatpush1.msra.mxu0 0.0
    %398 = vmatprep.subr.mxu0 0.0
    %399 = vmatpush1.msra.mxu0 0.0
    %400 = vmatprep.subr.mxu0 0.0
    %401 = vmatpush1.msra.mxu0 0.0
    %402 = vmatprep.mubr.f32.mxu0 0.0
    %403 = vmatmul.mubr.f32.gmra.mrb[0].mxu0 %v99
    %v404 = vpop.f32.mrb[0].mxu0
    %v405 = vadd.f32 %v336, %v404
    %v406 = vpop.f32.mrb[0].mxu0
    %407 = vmatprep.mubr.f32.mxu0 0.0
    %408 = vmatmul.mubr.f32.gmra.mrb[0].mxu0 %v102
    %v409 = vpop.f32.mrb[0].mxu0
    %v410 = vadd.f32 %v336, %v409
    %v411 = vpop.f32.mrb[0].mxu0
    %412 = vmatprep.mubr.f32.mxu0 0.0
    %413 = vmatmul.mubr.f32.gmra.mrb[0].mxu0 %v105
    %v414 = vpop.f32.mrb[0].mxu0
    %v415 = vadd.f32 %v336, %v414
    %v416 = vpop.f32.mrb[0].mxu0
    %417 = vmatprep.mubr.f32.mxu0 0.0
    %418 = vmatmul.mubr.f32.gmra.mrb[0].mxu0 %v108
    %v419 = vpop.f32.mrb[0].mxu0
    %v420 = vadd.f32 %v336, %v419
    %v421 = vpop.f32.mrb[0].mxu0
    %422 = vdwg.mxu0
    %v423 = vmul.f32 %v309, %v405
    %v424 = vmul.f32 %v314, %v410
    %v425 = vmul.f32 %v319, %v415
    %v426 = vmul.f32 %v324, %v420
    %vm427 = vcmask 523264
    %v428 = vsel %vm427, %v423, 0.0
    %429 = vadd.xlane.f32.xlu0 %v428
    %v430 = vpop.xlane.xlu0 %429
    %v431 = vsel %vm427, %v424, 0.0
    %432 = vadd.xlane.f32.xlu0 %v431
    %v433 = vpop.xlane.xlu0 %432
    %v434 = vsel %vm427, %v425, 0.0
    %435 = vadd.xlane.f32.xlu0 %v434
    %v436 = vpop.xlane.xlu0 %435
    %v437 = vsel %vm427, %v426, 0.0
    %438 = vadd.xlane.f32.xlu0 %v437
    %v439 = vpop.xlane.xlu0 %438
    %v440 = vmul.f32 %v82, %v227
    %v441 = vmul.f32 %v83, %v228
    %v442 = vmul.f32 %v84, %v229
    %v443 = vmul.f32 %v85, %v230
    %v444 = vmul.f32 %v440, %v430
    %v445 = vmul.f32 %v441, %v433
    %v446 = vmul.f32 %v442, %v436
    %v447 = vmul.f32 %v443, %v439
    %448 = vst.msk [vmem:[#allocation10] sm:$0xff] %vm97, %v444
    %449 = vst.msk [vmem:[#allocation10 + $0x8] sm:$0xff] %vm97, %v445
    %450 = vst.msk [vmem:[#allocation10 + $0x10] sm:$0xff] %vm97, %v446
    %451 = vst.msk [vmem:[#allocation10 + $0x18] sm:$0xff] %vm97, %v447
    // Predicated region
    $region46: #{tpu_custom_call.1} parent=1 // pred_check
      _
    $region47: #{tpu_custom_call.1} parent=1 // pred_check_branch
      %453 = sbr.rel (0) target = $region49
    $region48: #{tpu_custom_call.1} parent=1 // pred_region
      %s455 = ssub.s32 512, 512
      %456 = vsyncadd [#allocation4], %s455
      %s457 = sshll.u32 [#allocation10], 4
      %s458 = int_to_ptr.vmem [resolvable:$true] %s457
      %463 = dma.vmem_to_hbm [thread:$0]  %s458, 512, %s7, [#allocation4], 128, 128, 8
    $region49: #{tpu_custom_call.1} parent=1 // pred_fallthru
      _
    // Predicated region
    $region50: #{tpu_custom_call.1} parent=1 // pred_check
      _
    $region51: #{tpu_custom_call.1} parent=1 // pred_check_branch
      %465 = sbr.rel (0) target = $region53
    $region52: #{tpu_custom_call.1} parent=1 // pred_region
      %466 = dma.done [#allocation4], 512
    $region53: #{tpu_custom_call.1} parent=1 // pred_fallthru
      _
    %467 = vsyncpa [#allocation3], 1
    %468 = vsyncpa [#allocation6], 1
    %469 = vsyncpa [#allocation9], 1
    %470 = vsyncpa [#allocation4], 1

</llo_original>
